<compile_context>
chip_gen: v5e
topology: v5e:2x2
jax: 0.10.0
libtpu: 0.0.40
codegen_flags: <defaults>
</compile_context>

<pallas_src>
import functools
import math

import jax
import jax.numpy as jnp
from jax import lax
from jax.experimental import pallas as pl
from jax.experimental.pallas import tpu as pltpu


def _round_up(x, m):
    return (x + m - 1) // m * m


# --------------------------------------------------------------------------
# Pallas kernel: masked additive-attention scores + softmax + context
# --------------------------------------------------------------------------
def _att_loc_rec_kernel(lens_ref,   # VMEM (Bb, 1, 1) int32 lengths
                        enc_ref,    # VMEM (Bb, T, Denc)   matmul dtype
                        add_ref,    # VMEM (Bb, 1, A) f32  = dec_proj + att_h + b_enc
                        w_enc_ref,  # VMEM (Denc, A)       matmul dtype
                        w_g_ref,    # VMEM (1, A)          matmul dtype
                        c_ref,      # VMEM (Bb, 1, Denc) f32
                        w_ref,      # VMEM (Bb, 1, T)    f32 (lane-dense)
                        *, scaling):
    Bb, T, Denc = enc_ref.shape
    A = w_enc_ref.shape[1]

    enc = enc_ref[...]                                       # (Bb, T, Denc)
    cdt = enc.dtype

    # (1) pre-activation: enc @ W_enc on the MXU (f32 accumulate), plus the
    #     hoisted additive vector (decoder proj + att LSTM hidden + b_enc).
    pre = jnp.dot(enc.reshape(Bb * T, Denc), w_enc_ref[...],
                  preferred_element_type=jnp.float32)        # (Bb*T, A)
    pre = pre.reshape(Bb, T, A) + add_ref[...]               # + (Bb, 1, A) bcast
    z = jnp.tanh(pre.astype(cdt))                            # (Bb, T, A)  EUP

    # (2) gvec scores, contraction over A on the MXU — no explicit z.T:
    #     (Bb, 1, A) x (Bb, T, A) -> (Bb, 1, T), lane-dense in T.
    wg = jnp.broadcast_to(w_g_ref[...].reshape(1, 1, A), (Bb, 1, A))
    e = jnp.einsum('boa,bta->bot', wg, z,
                   preferred_element_type=jnp.float32)       # (Bb, 1, T) f32

    # (3) pad mask: positions t >= length -> -inf (matches masked_fill_)
    lens = lens_ref[...]                                     # (Bb, 1, 1) int32
    idx = lax.broadcasted_iota(jnp.int32, (Bb, 1, T), 2)
    e = jnp.where(idx >= lens, -jnp.inf, e)

    # (4) softmax over T (lane axis); EUP reciprocal for the normalisation.
    se = scaling * e
    m = jnp.max(se, axis=-1, keepdims=True)                  # (Bb, 1, 1)
    p = jnp.exp(se - m)
    w = p * pl.reciprocal(jnp.sum(p, axis=-1, keepdims=True), approx=True)

    # (5) context: (Bb, 1, T) @ (Bb, T, Denc) -> (Bb, 1, Denc) on the MXU.
    c = jnp.einsum('bqt,btd->bqd', w.astype(cdt), enc,
                   preferred_element_type=jnp.float32)

    w_ref[...] = w
    c_ref[...] = c


def _choose_bb(B, T_pad, Denc_pad, A_pad, enc_bytes):
    """Pick the batch-block size from a conservative VMEM budget."""
    per_sample = (2 * T_pad * Denc_pad * enc_bytes          # enc, double buffered
                  + T_pad * A_pad * (4 + enc_bytes)         # pre (f32) + z
                  + 6 * T_pad * 4                           # e / p / w rows
                  + 2 * (Denc_pad + T_pad) * 4)             # outputs, double buffered
    budget = 28 * 1024 * 1024     # conservative so the kernel also fits v7x's 64 MiB VMEM
    bb = max(1, min(budget // per_sample, B))
    if bb >= B and B >= 16:
        # keep >= 2 grid steps so v7x can split the batch loop across its 2 TCs
        bb = (B + 1) // 2
    return int(bb)


# --------------------------------------------------------------------------
# Full AttLocRec forward (wrapper hoists the tiny recurrent location machinery)
# --------------------------------------------------------------------------
def att_loc_rec_forward(enc_hs_pad, enc_hs_len, dec_z, att_prev_states,
                        params, scaling=2.0, matmul_dtype=jnp.bfloat16,
                        enc_buffers=None):
    """Returns (c, (w, (att_h, att_c))) exactly like AttLocRec.forward.

    matmul_dtype: dtype of the MXU operands inside the kernel (bf16 default;
                  use jnp.float32 on v5e).  Accumulation is always f32.
    enc_buffers:  optional pipeline depth for the enc stream (e.g. 3 on v5e).
    """
    enc_f32 = jnp.asarray(enc_hs_pad, jnp.float32)
    B, T, Denc = enc_f32.shape
    Ddec, A = params["w_dec"].shape
    lens = jnp.asarray(enc_hs_len, jnp.int32).reshape(B)

    if dec_z is None:
        dec_z = jnp.zeros((B, Ddec), jnp.float32)
    else:
        dec_z = jnp.asarray(dec_z, jnp.float32).reshape(B, Ddec)

    if att_prev_states is None:
        # uniform attention over valid frames: (1 - pad_mask) / length
        valid = jnp.arange(T)[None, :] < lens[:, None]
        att_prev = valid.astype(jnp.float32) / lens[:, None].astype(jnp.float32)
        att_h = jnp.zeros((B, A), jnp.float32)
        att_c = jnp.zeros((B, A), jnp.float32)
    else:
        att_prev = jnp.asarray(att_prev_states[0], jnp.float32)
        att_h = jnp.asarray(att_prev_states[1][0], jnp.float32)
        att_c = jnp.asarray(att_prev_states[1][1], jnp.float32)

    # ---- location feature: 1D conv over T (+ relu + global max-pool) ----
    conv_w = params["conv_w"]                     # (C, K) with K = 2*filts + 1
    C, K = conv_w.shape
    filts = (K - 1) // 2
    att_pad = jnp.pad(att_prev, ((0, 0), (filts, filts)))
    wins = jnp.stack([att_pad[:, k:k + T] for k in range(K)], axis=1)   # (B, K, T)
    conv_out = jnp.einsum("bkt,ck->bct", wins, conv_w)                  # (B, C, T)
    att_feat = jnp.max(jax.nn.relu(conv_out), axis=-1)                  # (B, C)

    # ---- attention LSTM cell (bias=False), PyTorch gate order i, f, g, o ----
    gates = att_feat @ params["w_ih"].T + att_h @ params["w_hh"].T      # (B, 4A)
    gi, gf, gg, go = jnp.split(gates, 4, axis=-1)
    att_c_new = jax.nn.sigmoid(gf) * att_c + jax.nn.sigmoid(gi) * jnp.tanh(gg)
    att_h_new = jax.nn.sigmoid(go) * jnp.tanh(att_c_new)                # (B, A)

    # ---- hoisted decoder projection; fold b_enc into one additive vector ----
    # NOTE: gvec bias b_g is mathematically inert (softmax shift invariance),
    # so it is not passed to the kernel.
    add_vec = (dec_z @ params["w_dec"] + att_h_new
               + params["b_enc"]).reshape(B, 1, A)                      # (B, 1, A)

    # ---- lane-dense padding (multiples of 128 on every lane dimension) ----
    T_pad = _round_up(T, 128)
    Denc_pad = _round_up(Denc, 128)
    A_pad = _round_up(A, 128)
    enc_bytes = jnp.dtype(matmul_dtype).itemsize
    Bb = _choose_bb(B, T_pad, Denc_pad, A_pad, enc_bytes)
    B_pad = _round_up(B, Bb)

    enc_p = jnp.pad(enc_f32, ((0, B_pad - B), (0, T_pad - T),
                              (0, Denc_pad - Denc))).astype(matmul_dtype)
    add_p = jnp.pad(add_vec, ((0, B_pad - B), (0, 0), (0, A_pad - A)))
    w_enc_p = jnp.pad(params["w_enc"],
                      ((0, Denc_pad - Denc), (0, A_pad - A))).astype(matmul_dtype)
    w_g_p = jnp.pad(params["w_g"].reshape(1, A),
                    ((0, 0), (0, A_pad - A))).astype(matmul_dtype)
    # padded batch rows get length 1 so their (discarded) softmax stays finite
    lens_p = jnp.pad(lens, (0, B_pad - B),
                     constant_values=1).reshape(B_pad, 1, 1)

    kernel = functools.partial(_att_loc_rec_kernel, scaling=float(scaling))

    enc_index_map = lambda i: (i, 0, 0)
    if enc_buffers is None:
        enc_spec = pl.BlockSpec((Bb, T_pad, Denc_pad), enc_index_map)
    else:
        # e.g. enc_buffers=3 on bandwidth-poor v5e to hide DMA jitter
        enc_spec = pl.BlockSpec((Bb, T_pad, Denc_pad), enc_index_map,
                                pipeline_mode=pl.Buffered(enc_buffers))

    grid_spec = pltpu.PrefetchScalarGridSpec(
        num_scalar_prefetch=0,
        grid=(B_pad // Bb,),
        in_specs=[
            pl.BlockSpec((Bb, 1, 1), lambda i: (i, 0, 0)),              # lengths
            enc_spec,                                                   # enc
            pl.BlockSpec((Bb, 1, A_pad), lambda i: (i, 0, 0)),          # add_vec
            pl.BlockSpec((Denc_pad, A_pad), lambda i: (0, 0)),          # w_enc
            pl.BlockSpec((1, A_pad), lambda i: (0, 0)),                 # w_g row
        ],
        out_specs=[
            pl.BlockSpec((Bb, 1, Denc_pad), lambda i: (i, 0, 0)),       # c
            pl.BlockSpec((Bb, 1, T_pad), lambda i: (i, 0, 0)),          # w
        ],
    )

    # TODO(synk): for very long T the whole (Bb, T, Denc) block must fit VMEM;
    # an online-softmax T-tiling (second 'arbitrary' grid axis) would lift that
    # limit on v7x's 64 MiB VMEM — not implemented here.
    c3, w3 = pl.pallas_call(
        kernel,
        out_shape=(jax.ShapeDtypeStruct((B_pad, 1, Denc_pad), jnp.float32),
                   jax.ShapeDtypeStruct((B_pad, 1, T_pad), jnp.float32)),
        grid_spec=grid_spec,
        compiler_params=pltpu.CompilerParams(
            dimension_semantics=("parallel",),
            vmem_limit_bytes=48 * 1024 * 1024),
    )(lens_p, enc_p, add_p, w_enc_p, w_g_p)

    c = c3[:B, 0, :Denc]
    w = w3[:B, 0, :T]
    return c, (w, (att_h_new, att_c_new))


# --------------------------------------------------------------------------
# Parameter init mimicking torch defaults (uniform +-1/sqrt(fan_in))
# --------------------------------------------------------------------------
def init_att_loc_rec_params(key, eprojs, dunits, att_dim, aconv_chans, aconv_filts):
    ks = jax.random.split(key, 8)
    K = 2 * aconv_filts + 1
    be = 1.0 / math.sqrt(eprojs)
    bd = 1.0 / math.sqrt(dunits)
    bg = 1.0 / math.sqrt(att_dim)
    bc = 1.0 / math.sqrt(1 * 1 * K)        # Conv2d fan_in = in_ch * kh * kw
    bl = 1.0 / math.sqrt(att_dim)          # LSTMCell: 1/sqrt(hidden)

    def u(k, shape, b):
        return jax.random.uniform(k, shape, jnp.float32, -b, b)

    return {
        # linear weights stored as (in_features, out_features)
        "w_enc":  u(ks[0], (eprojs, att_dim), be),
        "b_enc":  u(ks[1], (1, att_dim), be),
        "w_dec":  u(ks[2], (dunits, att_dim), bd),
        "conv_w": u(ks[3], (aconv_chans, K), bc),        # torch (C,1,1,K) squeezed
        "w_ih":   u(ks[4], (4 * att_dim, aconv_chans), bl),
        "w_hh":   u(ks[5], (4 * att_dim, att_dim), bl),
        "w_g":    u(ks[6], (att_dim, 1), bg),
        "b_g":    u(ks[7], (1, 1), bg),                  # inert (softmax shift)
    }


# --------------------------------------------------------------------------
# Pure-JAX reference for correctness checking (mirrors the torch module)
# --------------------------------------------------------------------------
def _reference_forward(enc_hs_pad, enc_hs_len, dec_z, att_prev_states,
                       params, scaling=2.0):
    enc_hs_pad = jnp.asarray(enc_hs_pad, jnp.float32)
    B, T, _ = enc_hs_pad.shape
    Ddec, A = params["w_dec"].shape
    lens = jnp.asarray(enc_hs_len, jnp.int32)

    if dec_z is None:
        dec_z = jnp.zeros((B, Ddec), jnp.float32)
    else:
        dec_z = jnp.asarray(dec_z, jnp.float32).reshape(B, Ddec)

    if att_prev_states is None:
        valid = jnp.arange(T)[None, :] < lens[:, None]
        att_prev = valid.astype(jnp.float32) / lens[:, None].astype(jnp.float32)
        att_h = jnp.zeros((B, A), jnp.float32)
        att_c = jnp.zeros((B, A), jnp.float32)
    else:
        att_prev = jnp.asarray(att_prev_states[0], jnp.float32)
        att_h, att_c = (jnp.asarray(s, jnp.float32) for s in att_prev_states[1])

    conv_w = params["conv_w"]
    C, K = conv_w.shape
    filts = (K - 1) // 2
    att_pad = jnp.pad(att_prev, ((0, 0), (filts, filts)))
    wins = jnp.stack([att_pad[:, k:k + T] for k in range(K)], axis=1)
    conv_out = jnp.einsum("bkt,ck->bct", wins, conv_w)
    att_feat = jnp.max(jax.nn.relu(conv_out), axis=-1)

    gates = att_feat @ params["w_ih"].T + att_h @ params["w_hh"].T
    gi, gf, gg, go = jnp.split(gates, 4, axis=-1)
    att_c_new = jax.nn.sigmoid(gf) * att_c + jax.nn.sigmoid(gi) * jnp.tanh(gg)
    att_h_new = jax.nn.sigmoid(go) * jnp.tanh(att_c_new)

    pre = enc_hs_pad @ params["w_enc"] + params["b_enc"]                # (B, T, A)
    dec_proj = (dec_z @ params["w_dec"])[:, None, :]                    # (B, 1, A)
    e = jnp.squeeze(
        jnp.tanh(pre + dec_proj + att_h_new[:, None, :]) @ params["w_g"], -1)
    e = e + params["b_g"][0, 0]
    mask = jnp.arange(T)[None, :] >= lens[:, None]
    e = jnp.where(mask, -jnp.inf, e)
    w = jax.nn.softmax(scaling * e, axis=1)
    c = jnp.sum(enc_hs_pad * w[:, :, None], axis=1)
    return c, (w, (att_h_new, att_c_new))


if __name__ == "__main__":
    B, T, EPROJS, DUNITS, ATT_DIM = 2, 8, 16, 32, 32
    ACONV_CHANS, ACONV_FILTS = 4, 2

    key = jax.random.PRNGKey(0)
    kx, kz, kp = jax.random.split(key, 3)

    enc_hs_pad = jax.random.normal(kx, (B, T, EPROJS), jnp.float32)
    dec_z = jax.random.normal(kz, (B, DUNITS), jnp.float32)
    enc_hs_len = [8, 5]

    params = init_att_loc_rec_params(kp, EPROJS, DUNITS, ATT_DIM,
                                     ACONV_CHANS, ACONV_FILTS)

    # --- step 1: f32 matmul path, tight check vs pure-JAX reference -----------
    c1, (w1, st1) = att_loc_rec_forward(enc_hs_pad, enc_hs_len, dec_z, None,
                                        params, matmul_dtype=jnp.float32)
    jax.block_until_ready((c1, w1, st1))
    c1_r, (w1_r, st1_r) = _reference_forward(enc_hs_pad, enc_hs_len, dec_z,
                                             None, params)
    assert c1.shape == (B, EPROJS) and w1.shape == (B, T)
    assert jnp.allclose(c1, c1_r, atol=2e-3, rtol=2e-3)
    assert jnp.allclose(w1, w1_r, atol=2e-3, rtol=2e-3)

    # --- step 2: feed the recurrent states back (exercises the recurrent path) -
    c2, (w2, st2) = att_loc_rec_forward(enc_hs_pad, enc_hs_len, dec_z,
                                        (w1, st1), params,
                                        matmul_dtype=jnp.float32)
    jax.block_until_ready((c2, w2, st2))
    c2_r, (w2_r, _) = _reference_forward(enc_hs_pad, enc_hs_len, dec_z,
                                         (w1_r, st1_r), params)
    assert jnp.allclose(c2, c2_r, atol=2e-3, rtol=2e-3)
    assert jnp.allclose(w2, w2_r, atol=2e-3, rtol=2e-3)

    # --- step 3: default bf16 matmul path (perf config), looser check ----------
    cb, (wb, _) = att_loc_rec_forward(enc_hs_pad, enc_hs_len, dec_z, None, params)
    jax.block_until_ready((cb, wb))
    assert jnp.allclose(cb, c1_r, atol=8e-2, rtol=8e-2)
    assert jnp.allclose(wb, w1_r, atol=8e-2, rtol=8e-2)

    print("KERNEL_OK")
</pallas_src>

<mosaic_0001>
module attributes {stable_mosaic.version = 11 : i64} {
  func.func @_att_loc_rec_kernel(%arg0: i32, %arg1: memref<2x1x1xi32, #tpu.memory_space<vmem>>, %arg2: memref<2x128x128xf32, #tpu.memory_space<vmem>>, %arg3: memref<2x1x128xf32, #tpu.memory_space<vmem>>, %arg4: memref<128x128xf32, #tpu.memory_space<vmem>>, %arg5: memref<1x128xf32, #tpu.memory_space<vmem>>, %arg6: memref<2x1x128xf32, #tpu.memory_space<vmem>>, %arg7: memref<2x1x128xf32, #tpu.memory_space<vmem>>) attributes {dimension_semantics = [#tpu.dimension_semantics<parallel>], iteration_bounds = array<i64: 1>, scalar_prefetch = 0 : i64, scratch_operands = 0 : i64, tpu.core_type = #tpu.core_type<tc>, window_params = [{transform_indices = @transform_0, window_bounds = array<i64: 2, 1, 1>}, {transform_indices = @transform_1, window_bounds = array<i64: 2, 128, 128>}, {transform_indices = @transform_2, window_bounds = array<i64: 2, 1, 128>}, {pipeline_mode = #tpu.pipeline_mode<synchronous>, transform_indices = @transform_3, window_bounds = array<i64: 128, 128>}, {pipeline_mode = #tpu.pipeline_mode<synchronous>, transform_indices = @transform_4, window_bounds = array<i64: 1, 128>}, {transform_indices = @transform_5, window_bounds = array<i64: 2, 1, 128>}, {transform_indices = @transform_6, window_bounds = array<i64: 2, 1, 128>}]} {
    %c0 = arith.constant 0 : index
    %c0_0 = arith.constant 0 : index
    %c0_1 = arith.constant 0 : index
    %0 = vector.load %arg2[%c0, %c0_0, %c0_1] : memref<2x128x128xf32, #tpu.memory_space<vmem>>, vector<2x128x128xf32>
    %1 = vector.shape_cast %0 : vector<2x128x128xf32> to vector<256x128xf32>
    %c0_2 = arith.constant 0 : index
    %c0_3 = arith.constant 0 : index
    %2 = vector.load %arg4[%c0_2, %c0_3] : memref<128x128xf32, #tpu.memory_space<vmem>>, vector<128x128xf32>
    %cst = arith.constant dense<0.000000e+00> : vector<256x128xf32>
    %3 = tpu.matmul %1, %2, %cst {dimension_numbers = #tpu.dot_dimension_numbers<[1], [0], [0], [1], [0, 0, 1, 1], [], []>} : vector<256x128xf32>, vector<128x128xf32>, vector<256x128xf32> -> vector<256x128xf32>
    %4 = vector.shape_cast %3 : vector<256x128xf32> to vector<2x128x128xf32>
    %c0_4 = arith.constant 0 : index
    %c0_5 = arith.constant 0 : index
    %c0_6 = arith.constant 0 : index
    %5 = vector.load %arg3[%c0_4, %c0_5, %c0_6] : memref<2x1x128xf32, #tpu.memory_space<vmem>>, vector<2x1x128xf32>
    %6 = vector.broadcast %5 : vector<2x1x128xf32> to vector<2x128x128xf32>
    %7 = arith.addf %4, %6 : vector<2x128x128xf32>
    %8 = math.tanh %7 : vector<2x128x128xf32>
    %c0_7 = arith.constant 0 : index
    %c0_8 = arith.constant 0 : index
    %9 = vector.load %arg5[%c0_7, %c0_8] : memref<1x128xf32, #tpu.memory_space<vmem>>, vector<1x128xf32>
    %10 = vector.shape_cast %9 : vector<1x128xf32> to vector<1x1x128xf32>
    %11 = vector.shape_cast %10 : vector<1x1x128xf32> to vector<1x1x128xf32>
    %12 = vector.broadcast %11 : vector<1x1x128xf32> to vector<2x1x128xf32>
    "tpu.trace_start"() <{level = 10 : i32, message = "boa,bta->bot"}> : () -> ()
    %cst_9 = arith.constant dense<0.000000e+00> : vector<2x1x128xf32>
    %13 = tpu.matmul %12, %8, %cst_9 {dimension_numbers = #tpu.dot_dimension_numbers<[2], [2], [1], [1], [0, 0, 0, 1, 1, 1], [0], [0]>} : vector<2x1x128xf32>, vector<2x128x128xf32>, vector<2x1x128xf32> -> vector<2x1x128xf32>
    "tpu.trace_stop"() : () -> ()
    %c0_10 = arith.constant 0 : index
    %c0_11 = arith.constant 0 : index
    %c0_12 = arith.constant 0 : index
    %14 = vector.load %arg1[%c0_10, %c0_11, %c0_12] : memref<2x1x1xi32, #tpu.memory_space<vmem>>, vector<2x1x1xi32>
    %15 = tpu.iota {dimensions = array<i32: 2>} : vector<2x1x128xi32>
    %16 = vector.broadcast %14 : vector<2x1x1xi32> to vector<2x1x128xi32>
    %17 = arith.cmpi sge, %15, %16 : vector<2x1x128xi32>
    %cst_13 = arith.constant 0xFF800000 : f32
    %18 = vector.broadcast %cst_13 : f32 to vector<2x1x128xf32>
    %19 = arith.select %17, %18, %13 : vector<2x1x128xi1>, vector<2x1x128xf32>
    %cst_14 = arith.constant 2.000000e+00 : f32
    %20 = vector.broadcast %cst_14 : f32 to vector<2x1x128xf32>
    %21 = arith.mulf %20, %19 : vector<2x1x128xf32>
    %cst_15 = arith.constant dense<0xFF800000> : vector<2x1xf32>
    %22 = vector.multi_reduction <maximumf>, %21, %cst_15 [2] : vector<2x1x128xf32> to vector<2x1xf32>
    %23 = vector.shape_cast %22 : vector<2x1xf32> to vector<2x1x1xf32>
    %24 = vector.broadcast %23 : vector<2x1x1xf32> to vector<2x1x128xf32>
    %25 = arith.subf %21, %24 : vector<2x1x128xf32>
    %26 = math.exp %25 : vector<2x1x128xf32>
    %cst_16 = arith.constant dense<0.000000e+00> : vector<2x1xf32>
    %27 = vector.multi_reduction <add>, %26, %cst_16 [2] : vector<2x1x128xf32> to vector<2x1xf32>
    %28 = vector.shape_cast %27 : vector<2x1xf32> to vector<2x1x1xf32>
    %29 = tpu.reciprocal %28 {approx = true} : vector<2x1x1xf32> -> vector<2x1x1xf32>
    %30 = vector.broadcast %29 : vector<2x1x1xf32> to vector<2x1x128xf32>
    %31 = arith.mulf %26, %30 : vector<2x1x128xf32>
    "tpu.trace_start"() <{level = 10 : i32, message = "bqt,btd->bqd"}> : () -> ()
    %cst_17 = arith.constant dense<0.000000e+00> : vector<2x1x128xf32>
    %32 = tpu.matmul %31, %0, %cst_17 {dimension_numbers = #tpu.dot_dimension_numbers<[2], [1], [1], [2], [0, 0, 0, 1, 1, 2], [0], [0]>} : vector<2x1x128xf32>, vector<2x128x128xf32>, vector<2x1x128xf32> -> vector<2x1x128xf32>
    "tpu.trace_stop"() : () -> ()
    %c0_18 = arith.constant 0 : index
    %c0_19 = arith.constant 0 : index
    %c0_20 = arith.constant 0 : index
    %33 = vector.load %arg7[%c0_18, %c0_19, %c0_20] : memref<2x1x128xf32, #tpu.memory_space<vmem>>, vector<2x1x128xf32>
    tpu.vector_store %arg7[%c0_18, %c0_19, %c0_20], %31 {strides = array<i32>} : memref<2x1x128xf32, #tpu.memory_space<vmem>>, vector<2x1x128xf32>,
    %c0_21 = arith.constant 0 : index
    %c0_22 = arith.constant 0 : index
    %c0_23 = arith.constant 0 : index
    %34 = vector.load %arg6[%c0_21, %c0_22, %c0_23] : memref<2x1x128xf32, #tpu.memory_space<vmem>>, vector<2x1x128xf32>
    tpu.vector_store %arg6[%c0_21, %c0_22, %c0_23], %32 {strides = array<i32>} : memref<2x1x128xf32, #tpu.memory_space<vmem>>, vector<2x1x128xf32>,
    return
  }
  func.func @transform_0(%arg0: i32) -> (i32, i32, i32) {
    %c0_i32 = arith.constant 0 : i32
    %c0_i32_0 = arith.constant 0 : i32
    %c0_i32_1 = arith.constant 0 : i32
    return %arg0, %c0_i32, %c0_i32_0 : i32, i32, i32
  }
  func.func @transform_1(%arg0: i32) -> (i32, i32, i32) {
    %c0_i32 = arith.constant 0 : i32
    %c0_i32_0 = arith.constant 0 : i32
    %c0_i32_1 = arith.constant 0 : i32
    return %arg0, %c0_i32, %c0_i32_0 : i32, i32, i32
  }
  func.func @transform_2(%arg0: i32) -> (i32, i32, i32) {
    %c0_i32 = arith.constant 0 : i32
    %c0_i32_0 = arith.constant 0 : i32
    %c0_i32_1 = arith.constant 0 : i32
    return %arg0, %c0_i32, %c0_i32_0 : i32, i32, i32
  }
  func.func @transform_3(%arg0: i32) -> (i32, i32) {
    %c0_i32 = arith.constant 0 : i32
    %c0_i32_0 = arith.constant 0 : i32
    %c0_i32_1 = arith.constant 0 : i32
    return %c0_i32, %c0_i32_0 : i32, i32
  }
  func.func @transform_4(%arg0: i32) -> (i32, i32) {
    %c0_i32 = arith.constant 0 : i32
    %c0_i32_0 = arith.constant 0 : i32
    %c0_i32_1 = arith.constant 0 : i32
    return %c0_i32, %c0_i32_0 : i32, i32
  }
  func.func @transform_5(%arg0: i32) -> (i32, i32, i32) {
    %c0_i32 = arith.constant 0 : i32
    %c0_i32_0 = arith.constant 0 : i32
    %c0_i32_1 = arith.constant 0 : i32
    return %arg0, %c0_i32, %c0_i32_0 : i32, i32, i32
  }
  func.func @transform_6(%arg0: i32) -> (i32, i32, i32) {
    %c0_i32 = arith.constant 0 : i32
    %c0_i32_0 = arith.constant 0 : i32
    %c0_i32_1 = arith.constant 0 : i32
    return %arg0, %c0_i32, %c0_i32_0 : i32, i32, i32
  }
}

</mosaic_0001>

<llo_original>
// kernel: tpu_custom_call.1
$region0: #{tpu_custom_call.1}
  #allocation0 [shape = 'u32[]', space=smem, size = 0x4, offset = 0x4, fixed_abs, tag = 'smem constant byte address 0x4 - core index']
  #allocation1 [shape = 'u32[72,128]{1,0:T(1,128)}', space=vmem, size = 0x9000, scoped, tag = 'internal scratch']
  %s0 = inlined_call_operand.vmem [shape: s32[2,1,1], index: 0, kind: input, shape index: {}]
  %s1 = inlined_call_operand.hbm [shape: f32[2,128,128], index: 1, kind: input, shape index: {}]
  %s2 = inlined_call_operand.vmem [shape: f32[2,1,128], index: 2, kind: input, shape index: {}]
  %s3 = inlined_call_operand.hbm [shape: f32[128,128], index: 3, kind: input, shape index: {}]
  %s4 = inlined_call_operand.vmem [shape: f32[1,128], index: 4, kind: input, shape index: {}]
  %s5 = inlined_call_operand.hbm [shape: f32[2,1,128], index: 5, kind: output, shape index: {0}]
  %s6 = inlined_call_operand.hbm [shape: f32[2,1,128], index: 6, kind: output, shape index: {1}]
  %7 = xla_tuple %s5, %s6
  %s8 = sld [smem:[#allocation0]]
  $region46: #{tpu_custom_call.1} parent=0
    _
  %s10 = ssub.s32 1, %s8
  %s11 = scalar_select 0, %s10, %s8
  $region1: #{tpu_custom_call.1} parent=0
    #allocation2 [shape = 'u8[131072]{0}', space=vmem, size = 0x20000, scoped, tag = 'input window, operand 1, single buffered']
    #allocation3 [shape = 's32[1]{0}', space=sflag, size = 0x4, scoped, tag = 'scoped memory for tpu_custom_call.1']
    #allocation4 [shape = 's32[1]{0}', space=sflag, size = 0x4, scoped, tag = 'scoped memory for tpu_custom_call.1']
    #allocation5 [shape = 'u8[65536]{0}', space=vmem, size = 0x10000, scoped, tag = 'input window, operand 3, single buffered']
    #allocation6 [shape = 's32[1]{0}', space=sflag, size = 0x4, scoped, tag = 'scoped memory for tpu_custom_call.1']
    #allocation7 [shape = 'u8[1024]{0}', space=vmem, size = 0x400, scoped, tag = 'output window, operand 0, single buffered']
    #allocation8 [shape = 'u8[1024]{0}', space=vmem, size = 0x400, scoped, tag = 'output window, operand 1, single buffered']
    #allocation9 [shape = 's32[1]{0}', space=sflag, size = 0x4, scoped, tag = 'scoped memory for tpu_custom_call.1']
    %12 = vsyncpa [#allocation3], 0
    %13 = vsyncpa [#allocation6], 0
    %14 = vsyncpa [#allocation4], 0
    %15 = vsyncpa [#allocation9], 0
    // Predicated region
    $region2: #{tpu_custom_call.1} parent=1 // pred_check
      _
    $region3: #{tpu_custom_call.1} parent=1 // pred_check_branch
      %17 = sbr.rel (0) target = $region5
    $region4: #{tpu_custom_call.1} parent=1 // pred_region
      _
    $region5: #{tpu_custom_call.1} parent=1 // pred_fallthru
      _
    // Predicated region
    $region6: #{tpu_custom_call.1} parent=1 // pred_check
      _
    $region7: #{tpu_custom_call.1} parent=1 // pred_check_branch
      %19 = sbr.rel (0) target = $region9
    $region8: #{tpu_custom_call.1} parent=1 // pred_region
      %21 = vsyncadd [#allocation3], 0
      %s22 = sshll.u32 %s1, 4
      %s23 = int_to_ptr.hbm [resolvable:$true] %s22
      %s24 = sshll.u32 [#allocation2], 4
      %s25 = int_to_ptr.vmem [resolvable:$true] %s24
      %30 = dma.hbm_to_vmem [thread:$0]  %s23, 4096, %s25, [#allocation3], 128, 128, 8
    $region9: #{tpu_custom_call.1} parent=1 // pred_fallthru
      _
    // Predicated region
    $region10: #{tpu_custom_call.1} parent=1 // pred_check
      _
    $region11: #{tpu_custom_call.1} parent=1 // pred_check_branch
      %32 = sbr.rel (0) target = $region13
    $region12: #{tpu_custom_call.1} parent=1 // pred_region
      _
    $region13: #{tpu_custom_call.1} parent=1 // pred_fallthru
      _
    // Predicated region
    $region14: #{tpu_custom_call.1} parent=1 // pred_check
      _
    $region15: #{tpu_custom_call.1} parent=1 // pred_check_branch
      %34 = sbr.rel (0) target = $region17
    $region16: #{tpu_custom_call.1} parent=1 // pred_region
      %36 = vsyncadd [#allocation6], 0
      %s37 = sshll.u32 %s3, 4
      %s38 = int_to_ptr.hbm [resolvable:$true] %s37
      %s39 = sshll.u32 [#allocation5], 4
      %s40 = int_to_ptr.vmem [resolvable:$true] %s39
      %45 = dma.hbm_to_vmem [thread:$0]  %s38, 2048, %s40, [#allocation6], 128, 128, 8
    $region17: #{tpu_custom_call.1} parent=1 // pred_fallthru
      _
    // Predicated region
    $region18: #{tpu_custom_call.1} parent=1 // pred_check
      _
    $region19: #{tpu_custom_call.1} parent=1 // pred_check_branch
      %47 = sbr.rel (0) target = $region21
    $region20: #{tpu_custom_call.1} parent=1 // pred_region
      _
    $region21: #{tpu_custom_call.1} parent=1 // pred_fallthru
      _
    // Predicated region
    $region22: #{tpu_custom_call.1} parent=1 // pred_check
      _
    $region23: #{tpu_custom_call.1} parent=1 // pred_check_branch
      %49 = sbr.rel (0) target = $region25
    $region24: #{tpu_custom_call.1} parent=1 // pred_region
      %51 = dma.done [#allocation3], 4096
    $region25: #{tpu_custom_call.1} parent=1 // pred_fallthru
      _
    // Predicated region
    $region26: #{tpu_custom_call.1} parent=1 // pred_check
      _
    $region27: #{tpu_custom_call.1} parent=1 // pred_check_branch
      %53 = sbr.rel (0) target = $region29
    $region28: #{tpu_custom_call.1} parent=1 // pred_region
      %55 = dma.done [#allocation6], 2048
    $region29: #{tpu_custom_call.1} parent=1 // pred_fallthru
      _
    %v56 = vld [vmem:[#allocation2] sm:$0xff]
    %v57 = vld [vmem:[#allocation2 + $0x8] sm:$0xff]
    %v58 = vld [vmem:[#allocation2 + $0x10] sm:$0xff]
    %v59 = vld [vmem:[#allocation2 + $0x18] sm:$0xff]
    %v60 = vld [vmem:[#allocation2 + $0x20] sm:$0xff]
    %v61 = vld [vmem:[#allocation2 + $0x28] sm:$0xff]
    %v62 = vld [vmem:[#allocation2 + $0x30] sm:$0xff]
    %v63 = vld [vmem:[#allocation2 + $0x38] sm:$0xff]
    %v64 = vld [vmem:[#allocation2 + $0x40] sm:$0xff]
    %v65 = vld [vmem:[#allocation2 + $0x48] sm:$0xff]
    %v66 = vld [vmem:[#allocation2 + $0x50] sm:$0xff]
    %v67 = vld [vmem:[#allocation2 + $0x58] sm:$0xff]
    %v68 = vld [vmem:[#allocation2 + $0x60] sm:$0xff]
    %v69 = vld [vmem:[#allocation2 + $0x68] sm:$0xff]
    %v70 = vld [vmem:[#allocation2 + $0x70] sm:$0xff]
    %v71 = vld [vmem:[#allocation2 + $0x78] sm:$0xff]
    %v72 = vld [vmem:[#allocation2 + $0x80] sm:$0xff]
    %v73 = vld [vmem:[#allocation2 + $0x88] sm:$0xff]
    %v74 = vld [vmem:[#allocation2 + $0x90] sm:$0xff]
    %v75 = vld [vmem:[#allocation2 + $0x98] sm:$0xff]
    %v76 = vld [vmem:[#allocation2 + $0xa0] sm:$0xff]
    %v77 = vld [vmem:[#allocation2 + $0xa8] sm:$0xff]
    %v78 = vld [vmem:[#allocation2 + $0xb0] sm:$0xff]
    %v79 = vld [vmem:[#allocation2 + $0xb8] sm:$0xff]
    %v80 = vld [vmem:[#allocation2 + $0xc0] sm:$0xff]
    %v81 = vld [vmem:[#allocation2 + $0xc8] sm:$0xff]
    %v82 = vld [vmem:[#allocation2 + $0xd0] sm:$0xff]
    %v83 = vld [vmem:[#allocation2 + $0xd8] sm:$0xff]
    %v84 = vld [vmem:[#allocation2 + $0xe0] sm:$0xff]
    %v85 = vld [vmem:[#allocation2 + $0xe8] sm:$0xff]
    %v86 = vld [vmem:[#allocation2 + $0xf0] sm:$0xff]
    %v87 = vld [vmem:[#allocation2 + $0xf8] sm:$0xff]
    %v88 = vld [vmem:[#allocation5] sm:$0xff]
    %v89 = vld [vmem:[#allocation5 + $0x8] sm:$0xff]
    %v90 = vld [vmem:[#allocation5 + $0x10] sm:$0xff]
    %v91 = vld [vmem:[#allocation5 + $0x18] sm:$0xff]
    %v92 = vld [vmem:[#allocation5 + $0x20] sm:$0xff]
    %v93 = vld [vmem:[#allocation5 + $0x28] sm:$0xff]
    %v94 = vld [vmem:[#allocation5 + $0x30] sm:$0xff]
    %v95 = vld [vmem:[#allocation5 + $0x38] sm:$0xff]
    %v96 = vld [vmem:[#allocation5 + $0x40] sm:$0xff]
    %v97 = vld [vmem:[#allocation5 + $0x48] sm:$0xff]
    %v98 = vld [vmem:[#allocation5 + $0x50] sm:$0xff]
    %v99 = vld [vmem:[#allocation5 + $0x58] sm:$0xff]
    %v100 = vld [vmem:[#allocation5 + $0x60] sm:$0xff]
    %v101 = vld [vmem:[#allocation5 + $0x68] sm:$0xff]
    %v102 = vld [vmem:[#allocation5 + $0x70] sm:$0xff]
    %v103 = vld [vmem:[#allocation5 + $0x78] sm:$0xff]
    %104 = vmatpush.msra.mxu0 %v103
    %105 = vmatpush.msra.mxu0 %v102
    %106 = vmatpush.msra.mxu0 %v101
    %107 = vmatpush.msra.mxu0 %v100
    %108 = vmatpush.msra.mxu0 %v99
    %109 = vmatpush.msra.mxu0 %v98
    %110 = vmatpush.msra.mxu0 %v97
    %111 = vmatpush.msra.mxu0 %v96
    %112 = vmatpush.msra.mxu0 %v95
    %113 = vmatpush.msra.mxu0 %v94
    %114 = vmatpush.msra.mxu0 %v93
    %115 = vmatpush.msra.mxu0 %v92
    %116 = vmatpush.msra.mxu0 %v91
    %117 = vmatpush.msra.mxu0 %v90
    %118 = vmatpush.msra.mxu0 %v89
    %119 = vmatpush.msra.mxu0 %v88
    %120 = vmatmul.f32.gmra.mxu0 %v56
    %v121 = vpop.f32.mrf.mxu0
    %v122 = vadd.f32 0.0, %v121
    %123 = vmatmul.f32.gmra.mxu0 %v57
    %v124 = vpop.f32.mrf.mxu0
    %v125 = vadd.f32 0.0, %v124
    %126 = vmatmul.f32.gmra.mxu0 %v58
    %v127 = vpop.f32.mrf.mxu0
    %v128 = vadd.f32 0.0, %v127
    %129 = vmatmul.f32.gmra.mxu0 %v59
    %v130 = vpop.f32.mrf.mxu0
    %v131 = vadd.f32 0.0, %v130
    %132 = vmatmul.f32.gmra.mxu0 %v60
    %v133 = vpop.f32.mrf.mxu0
    %v134 = vadd.f32 0.0, %v133
    %135 = vmatmul.f32.gmra.mxu0 %v61
    %v136 = vpop.f32.mrf.mxu0
    %v137 = vadd.f32 0.0, %v136
    %138 = vmatmul.f32.gmra.mxu0 %v62
    %v139 = vpop.f32.mrf.mxu0
    %v140 = vadd.f32 0.0, %v139
    %141 = vmatmul.f32.gmra.mxu0 %v63
    %v142 = vpop.f32.mrf.mxu0
    %v143 = vadd.f32 0.0, %v142
    %144 = vmatmul.f32.gmra.mxu0 %v64
    %v145 = vpop.f32.mrf.mxu0
    %v146 = vadd.f32 0.0, %v145
    %147 = vmatmul.f32.gmra.mxu0 %v65
    %v148 = vpop.f32.mrf.mxu0
    %v149 = vadd.f32 0.0, %v148
    %150 = vmatmul.f32.gmra.mxu0 %v66
    %v151 = vpop.f32.mrf.mxu0
    %v152 = vadd.f32 0.0, %v151
    %153 = vmatmul.f32.gmra.mxu0 %v67
    %v154 = vpop.f32.mrf.mxu0
    %v155 = vadd.f32 0.0, %v154
    %156 = vmatmul.f32.gmra.mxu0 %v68
    %v157 = vpop.f32.mrf.mxu0
    %v158 = vadd.f32 0.0, %v157
    %159 = vmatmul.f32.gmra.mxu0 %v69
    %v160 = vpop.f32.mrf.mxu0
    %v161 = vadd.f32 0.0, %v160
    %162 = vmatmul.f32.gmra.mxu0 %v70
    %v163 = vpop.f32.mrf.mxu0
    %v164 = vadd.f32 0.0, %v163
    %165 = vmatmul.f32.gmra.mxu0 %v71
    %v166 = vpop.f32.mrf.mxu0
    %v167 = vadd.f32 0.0, %v166
    %168 = vmatmul.f32.gmra.mxu0 %v72
    %v169 = vpop.f32.mrf.mxu0
    %v170 = vadd.f32 0.0, %v169
    %171 = vmatmul.f32.gmra.mxu0 %v73
    %v172 = vpop.f32.mrf.mxu0
    %v173 = vadd.f32 0.0, %v172
    %174 = vmatmul.f32.gmra.mxu0 %v74
    %v175 = vpop.f32.mrf.mxu0
    %v176 = vadd.f32 0.0, %v175
    %177 = vmatmul.f32.gmra.mxu0 %v75
    %v178 = vpop.f32.mrf.mxu0
    %v179 = vadd.f32 0.0, %v178
    %180 = vmatmul.f32.gmra.mxu0 %v76
    %v181 = vpop.f32.mrf.mxu0
    %v182 = vadd.f32 0.0, %v181
    %183 = vmatmul.f32.gmra.mxu0 %v77
    %v184 = vpop.f32.mrf.mxu0
    %v185 = vadd.f32 0.0, %v184
    %186 = vmatmul.f32.gmra.mxu0 %v78
    %v187 = vpop.f32.mrf.mxu0
    %v188 = vadd.f32 0.0, %v187
    %189 = vmatmul.f32.gmra.mxu0 %v79
    %v190 = vpop.f32.mrf.mxu0
    %v191 = vadd.f32 0.0, %v190
    %192 = vmatmul.f32.gmra.mxu0 %v80
    %v193 = vpop.f32.mrf.mxu0
    %v194 = vadd.f32 0.0, %v193
    %195 = vmatmul.f32.gmra.mxu0 %v81
    %v196 = vpop.f32.mrf.mxu0
    %v197 = vadd.f32 0.0, %v196
    %198 = vmatmul.f32.gmra.mxu0 %v82
    %v199 = vpop.f32.mrf.mxu0
    %v200 = vadd.f32 0.0, %v199
    %201 = vmatmul.f32.gmra.mxu0 %v83
    %v202 = vpop.f32.mrf.mxu0
    %v203 = vadd.f32 0.0, %v202
    %204 = vmatmul.f32.gmra.mxu0 %v84
    %v205 = vpop.f32.mrf.mxu0
    %v206 = vadd.f32 0.0, %v205
    %207 = vmatmul.f32.gmra.mxu0 %v85
    %v208 = vpop.f32.mrf.mxu0
    %v209 = vadd.f32 0.0, %v208
    %210 = vmatmul.f32.gmra.mxu0 %v86
    %v211 = vpop.f32.mrf.mxu0
    %v212 = vadd.f32 0.0, %v211
    %213 = vmatmul.f32.gmra.mxu0 %v87
    %v214 = vpop.f32.mrf.mxu0
    %v215 = vadd.f32 0.0, %v214
    %216 = vdwg.mxu0
    %v217 = vld [vmem:[%s2] sm:$0x1]
    %v218 = vld [vmem:[%s2 + $0x1] sm:$0x1]
    %v221 = vperm.slane %v217, 0
    %v222 = vperm.slane %v218, 0
    %v225 = vadd.f32 %v122, %v221
    %v226 = vadd.f32 %v125, %v221
    %v227 = vadd.f32 %v128, %v221
    %v228 = vadd.f32 %v131, %v221
    %v229 = vadd.f32 %v134, %v221
    %v230 = vadd.f32 %v137, %v221
    %v231 = vadd.f32 %v140, %v221
    %v232 = vadd.f32 %v143, %v221
    %v233 = vadd.f32 %v146, %v221
    %v234 = vadd.f32 %v149, %v221
    %v235 = vadd.f32 %v152, %v221
    %v236 = vadd.f32 %v155, %v221
    %v237 = vadd.f32 %v158, %v221
    %v238 = vadd.f32 %v161, %v221
    %v239 = vadd.f32 %v164, %v221
    %v240 = vadd.f32 %v167, %v221
    %v241 = vadd.f32 %v170, %v222
    %v242 = vadd.f32 %v173, %v222
    %v243 = vadd.f32 %v176, %v222
    %v244 = vadd.f32 %v179, %v222
    %v245 = vadd.f32 %v182, %v222
    %v246 = vadd.f32 %v185, %v222
    %v247 = vadd.f32 %v188, %v222
    %v248 = vadd.f32 %v191, %v222
    %v249 = vadd.f32 %v194, %v222
    %v250 = vadd.f32 %v197, %v222
    %v251 = vadd.f32 %v200, %v222
    %v252 = vadd.f32 %v203, %v222
    %v253 = vadd.f32 %v206, %v222
    %v254 = vadd.f32 %v209, %v222
    %v255 = vadd.f32 %v212, %v222
    %v256 = vadd.f32 %v215, %v222
    %v257 = vtanh.pop %v225
    %v258 = vtanh.pop %v226
    %v259 = vtanh.pop %v227
    %v260 = vtanh.pop %v228
    %v261 = vtanh.pop %v229
    %v262 = vtanh.pop %v230
    %v263 = vtanh.pop %v231
    %v264 = vtanh.pop %v232
    %v265 = vtanh.pop %v233
    %v266 = vtanh.pop %v234
    %v267 = vtanh.pop %v235
    %v268 = vtanh.pop %v236
    %v269 = vtanh.pop %v237
    %v270 = vtanh.pop %v238
    %v271 = vtanh.pop %v239
    %v272 = vtanh.pop %v240
    %v273 = vtanh.pop %v241
    %v274 = vtanh.pop %v242
    %v275 = vtanh.pop %v243
    %v276 = vtanh.pop %v244
    %v277 = vtanh.pop %v245
    %v278 = vtanh.pop %v246
    %v279 = vtanh.pop %v247
    %v280 = vtanh.pop %v248
    %v281 = vtanh.pop %v249
    %v282 = vtanh.pop %v250
    %v283 = vtanh.pop %v251
    %v284 = vtanh.pop %v252
    %v285 = vtanh.pop %v253
    %v286 = vtanh.pop %v254
    %v287 = vtanh.pop %v255
    %v288 = vtanh.pop %v256
    %v289 = vld [vmem:[%s4] sm:$0x1]
    %290 = vmatpush.xpose.msra.mxu0 %v272
    %291 = vmatpush.xpose.msra.mxu0 %v271
    %292 = vmatpush.xpose.msra.mxu0 %v270
    %293 = vmatpush.xpose.msra.mxu0 %v269
    %294 = vmatpush.xpose.msra.mxu0 %v268
    %295 = vmatpush.xpose.msra.mxu0 %v267
    %296 = vmatpush.xpose.msra.mxu0 %v266
    %297 = vmatpush.xpose.msra.mxu0 %v265
    %298 = vmatpush.xpose.msra.mxu0 %v264
    %299 = vmatpush.xpose.msra.mxu0 %v263
    %300 = vmatpush.xpose.msra.mxu0 %v262
    %301 = vmatpush.xpose.msra.mxu0 %v261
    %302 = vmatpush.xpose.msra.mxu0 %v260
    %303 = vmatpush.xpose.msra.mxu0 %v259
    %304 = vmatpush.xpose.msra.mxu0 %v258
    %305 = vmatpush.xpose.msra.mxu0 %v257
    %306 = vmatmul.f32.gmra.mxu0 %v289
    %v307 = vpop.f32.mrf.mxu0
    %v308 = vadd.f32 0.0, %v307
    %309 = vdwg.mxu0
    %310 = vmatpush.xpose.msra.mxu0 %v288
    %311 = vmatpush.xpose.msra.mxu0 %v287
    %312 = vmatpush.xpose.msra.mxu0 %v286
    %313 = vmatpush.xpose.msra.mxu0 %v285
    %314 = vmatpush.xpose.msra.mxu0 %v284
    %315 = vmatpush.xpose.msra.mxu0 %v283
    %316 = vmatpush.xpose.msra.mxu0 %v282
    %317 = vmatpush.xpose.msra.mxu0 %v281
    %318 = vmatpush.xpose.msra.mxu0 %v280
    %319 = vmatpush.xpose.msra.mxu0 %v279
    %320 = vmatpush.xpose.msra.mxu0 %v278
    %321 = vmatpush.xpose.msra.mxu0 %v277
    %322 = vmatpush.xpose.msra.mxu0 %v276
    %323 = vmatpush.xpose.msra.mxu0 %v275
    %324 = vmatpush.xpose.msra.mxu0 %v274
    %325 = vmatpush.xpose.msra.mxu0 %v273
    %326 = vmatmul.f32.gmra.mxu0 %v289
    %v327 = vpop.f32.mrf.mxu0
    %v328 = vadd.f32 0.0, %v327
    %329 = vdwg.mxu0
    %v330 = vld [vmem:[%s0] sm:$0x1]
    %v331 = vld [vmem:[%s0 + $0x1] sm:$0x1]
    %v332 = vlaneseq
    %v333 = vand.u32 %v332, 127
    %334 = vset.pattern.permute.xlu0 0
    %335 = vperm.xlu0 %334, %v330
    %v336 = vpop.permute.xlu0 %335
    %v337 = vperm.slane %v336, 0
    %338 = vset.pattern.permute.xlu0 0
    %339 = vperm.xlu0 %338, %v331
    %v340 = vpop.permute.xlu0 %339
    %v341 = vperm.slane %v340, 0
    %vm342 = vcmp.ge.s32.totalorder %v333, %v337
    %vm343 = vcmp.ge.s32.totalorder %v333, %v341
    %v344 = vsel %vm342, -inf, %v308
    %v345 = vsel %vm343, -inf, %v328
    %v346 = vmul.f32 %v344, 2.0
    %v347 = vmul.f32 %v345, 2.0
    %vm348 = vcmask 1040384
    %v349 = vsel %vm348, %v346, -inf
    %350 = vmax.xlane.f32.xlu0 %v349
    %v351 = vpop.xlane.xlu0 %350
    %v352 = vsel %vm348, %v347, -inf
    %353 = vmax.xlane.f32.xlu0 %v352
    %v354 = vpop.xlane.xlu0 %353
    %v355 = vsub.f32 %v346, %v351
    %v356 = vsub.f32 %v347, %v354
    %v357 = vmul.f32 %v355, 1.442695
    %v358 = vpow.pop %v357
    %v359 = vmul.f32 %v356, 1.442695
    %v360 = vpow.pop %v359
    %v361 = vsel %vm348, %v358, 0.0
    %362 = vadd.xlane.f32.xlu0 %v361
    %v363 = vpop.xlane.xlu0 %362
    %v364 = vsel %vm348, %v360, 0.0
    %365 = vadd.xlane.f32.xlu0 %v364
    %v366 = vpop.xlane.xlu0 %365
    %v367 = vrcp.pop %v363
    %v368 = vrcp.pop %v366
    %v369 = vmul.f32 %v358, %v367
    %v370 = vmul.f32 %v360, %v368
    %371 = vmatpush.msra.mxu0 %v71
    %372 = vmatpush.msra.mxu0 %v70
    %373 = vmatpush.msra.mxu0 %v69
    %374 = vmatpush.msra.mxu0 %v68
    %375 = vmatpush.msra.mxu0 %v67
    %376 = vmatpush.msra.mxu0 %v66
    %377 = vmatpush.msra.mxu0 %v65
    %378 = vmatpush.msra.mxu0 %v64
    %379 = vmatpush.msra.mxu0 %v63
    %380 = vmatpush.msra.mxu0 %v62
    %381 = vmatpush.msra.mxu0 %v61
    %382 = vmatpush.msra.mxu0 %v60
    %383 = vmatpush.msra.mxu0 %v59
    %384 = vmatpush.msra.mxu0 %v58
    %385 = vmatpush.msra.mxu0 %v57
    %386 = vmatpush.msra.mxu0 %v56
    %387 = vmatmul.f32.gmra.mxu0 %v369
    %v388 = vpop.f32.mrf.mxu0
    %v389 = vadd.f32 0.0, %v388
    %390 = vdwg.mxu0
    %391 = vmatpush.msra.mxu0 %v87
    %392 = vmatpush.msra.mxu0 %v86
    %393 = vmatpush.msra.mxu0 %v85
    %394 = vmatpush.msra.mxu0 %v84
    %395 = vmatpush.msra.mxu0 %v83
    %396 = vmatpush.msra.mxu0 %v82
    %397 = vmatpush.msra.mxu0 %v81
    %398 = vmatpush.msra.mxu0 %v80
    %399 = vmatpush.msra.mxu0 %v79
    %400 = vmatpush.msra.mxu0 %v78
    %401 = vmatpush.msra.mxu0 %v77
    %402 = vmatpush.msra.mxu0 %v76
    %403 = vmatpush.msra.mxu0 %v75
    %404 = vmatpush.msra.mxu0 %v74
    %405 = vmatpush.msra.mxu0 %v73
    %406 = vmatpush.msra.mxu0 %v72
    %407 = vmatmul.f32.gmra.mxu0 %v370
    %v408 = vpop.f32.mrf.mxu0
    %v409 = vadd.f32 0.0, %v408
    %410 = vdwg.mxu0
    %411 = vst [vmem:[#allocation8] sm:$0x1] %v369
    %412 = vst [vmem:[#allocation8 + $0x1] sm:$0x1] %v370
    %413 = vst [vmem:[#allocation7] sm:$0x1] %v389
    %414 = vst [vmem:[#allocation7 + $0x1] sm:$0x1] %v409
    // Predicated region
    $region30: #{tpu_custom_call.1} parent=1 // pred_check
      _
    $region31: #{tpu_custom_call.1} parent=1 // pred_check_branch
      %416 = sbr.rel (0) target = $region33
    $region32: #{tpu_custom_call.1} parent=1 // pred_region
      %418 = vsyncadd [#allocation4], 0
      %s419 = sshll.u32 [#allocation7], 4
      %s420 = int_to_ptr.vmem [resolvable:$true] %s419
      %s421 = sshll.u32 %s5, 4
      %s422 = int_to_ptr.hbm [resolvable:$true] %s421
      %427 = dma.vmem_to_hbm [thread:$0]  %s420, 32, %s422, [#allocation4], 16, 16, 1
    $region33: #{tpu_custom_call.1} parent=1 // pred_fallthru
      _
    // Predicated region
    $region34: #{tpu_custom_call.1} parent=1 // pred_check
      _
    $region35: #{tpu_custom_call.1} parent=1 // pred_check_branch
      %429 = sbr.rel (0) target = $region37
    $region36: #{tpu_custom_call.1} parent=1 // pred_region
      %431 = vsyncadd [#allocation9], 0
      %s432 = sshll.u32 [#allocation8], 4
      %s433 = int_to_ptr.vmem [resolvable:$true] %s432
      %s434 = sshll.u32 %s6, 4
      %s435 = int_to_ptr.hbm [resolvable:$true] %s434
      %440 = dma.vmem_to_hbm [thread:$0]  %s433, 32, %s435, [#allocation9], 16, 16, 1
    $region37: #{tpu_custom_call.1} parent=1 // pred_fallthru
      _
    // Predicated region
    $region38: #{tpu_custom_call.1} parent=1 // pred_check
      _
    $region39: #{tpu_custom_call.1} parent=1 // pred_check_branch
      %442 = sbr.rel (0) target = $region41
    $region40: #{tpu_custom_call.1} parent=1 // pred_region
      %444 = dma.done [#allocation4], 32
    $region41: #{tpu_custom_call.1} parent=1 // pred_fallthru
      _
    // Predicated region
    $region42: #{tpu_custom_call.1} parent=1 // pred_check
      _
    $region43: #{tpu_custom_call.1} parent=1 // pred_check_branch
      %446 = sbr.rel (0) target = $region45
    $region44: #{tpu_custom_call.1} parent=1 // pred_region
      %448 = dma.done [#allocation9], 32
    $region45: #{tpu_custom_call.1} parent=1 // pred_fallthru
      _
    %449 = vsyncpa [#allocation3], 1
    %450 = vsyncpa [#allocation6], 1
    %451 = vsyncpa [#allocation4], 1
    %452 = vsyncpa [#allocation9], 1

</llo_original>
